<compile_context>
chip_gen: v5e
topology: v5e:2x2
jax: 0.10.0
libtpu: 0.0.40
codegen_flags: <defaults>
</compile_context>

<pallas_src>
import jax
import jax.numpy as jnp
from jax.experimental import pallas as pl
from jax.experimental.pallas import tpu as pltpu


_W_RESIDENT_BYTES = 6 * 1024 * 1024   # keep resident w (x2 buffers) well under VMEM
_MAX_RESIDENT_TN = 512                # resident path only when padded C fits one tile


def _round_up(v, m):
    return (v + m - 1) // m * m


def _sublane_multiple(dtype):
    # f32 -> 8, bf16 -> 16, int8/fp8 -> 32 (packed sublane tile heights).
    return max(8, 32 // jnp.dtype(dtype).itemsize)


# --------------------------------------------------------------------------- #
# Kernels
# --------------------------------------------------------------------------- #
def _small_fused_kernel(inv_t_ref, x_ref, w_ref, o_ref):
    """Whole-problem fused (x @ w) * (1/T); everything resident in VMEM."""
    logits = jnp.dot(x_ref[...], w_ref[...], preferred_element_type=jnp.float32)
    o_ref[...] = (logits * inv_t_ref[0]).astype(o_ref.dtype)


def _make_tiled_kernel(*, tk, w_resident, num_k):
    """One (tm, tn) output tile of (x @ w) * (1/T), K-last reduction grid."""

    def kernel(inv_t_ref, x_ref, w_ref, o_ref, *acc):
        k = pl.program_id(2)

        if w_resident:
            # Whole (padded) w lives in VMEM; take the current K slab.
            # (Resident mode implies a single N tile, so no lane slicing.)
            w_tile = w_ref[pl.ds(pl.multiple_of(k * tk, tk), tk), :]
        else:
            w_tile = w_ref[...]

        prod = jnp.dot(x_ref[...], w_tile, preferred_element_type=jnp.float32)

        if num_k == 1:
            # Single K step: no accumulator scratch at all.
            o_ref[...] = (prod * inv_t_ref[0]).astype(o_ref.dtype)
        else:
            acc_ref = acc[0]

            @pl.when(k == 0)
            def _():
                acc_ref[...] = prod          # direct write: no zero-init pass

            @pl.when(k != 0)
            def _():
                acc_ref[...] = acc_ref[...] + prod

            @pl.when(k == num_k - 1)
            def _():
                # Temperature scaling == broadcast multiply by the precomputed
                # reciprocal on the f32 accumulator (no per-element divide).
                o_ref[...] = (acc_ref[...] * inv_t_ref[0]).astype(o_ref.dtype)

    return kernel


# --------------------------------------------------------------------------- #
# Wrapper
# --------------------------------------------------------------------------- #
def _fits_fast_path(B, H, C, x_dtype, w_dtype, limit_bytes=4 * 1024 * 1024):
    isx = jnp.dtype(x_dtype).itemsize
    isw = jnp.dtype(w_dtype).itemsize
    est = (_round_up(B, 8) * _round_up(H, 128) * isx
           + _round_up(H, 8) * _round_up(C, 128) * isw
           + _round_up(B, 8) * _round_up(C, 128) * 4)
    return est <= limit_bytes


def temperature_scaled_forward(
    x,
    w,
    temperature,
    cnn=False,
    *,
    tm=256,
    tn=256,
    tk=512,
    matmul_dtype=None,
    w_resident=None,
    use_fast_path=None,
):
    """TemperatureScaler.forward for a synthetic linear `model` (x @ w).

    x: (B, H) inputs (or (H,) -> treated as batch of 1, mirroring unsqueeze(0)),
    w: (H, C) model weights, temperature: scalar parameter (init 1.5 in PyTorch).
    Returns (B, C) float32 temperature-scaled logits.

    `cnn=True` in the module just selects logits = model(x)[0]; the synthetic
    linear model returns a single array, so it is a no-op here.
    """
    del cnn  # no-op for the synthetic linear model

    if x.ndim == 1:          # 1-D logits path of the module (unsqueeze(0))
        x = x[None, :]

    B, H = x.shape
    H2, C = w.shape
    assert H == H2, (H, H2)

    if matmul_dtype is not None:
        # bf16 MXU inputs on v6e/v7x (~2x MXU rate, ~2x less HBM/VMEM traffic);
        # accumulation and the temperature scale remain f32.
        x = x.astype(matmul_dtype)
        w = w.astype(matmul_dtype)

    # Reciprocal computed once outside the kernel; kernel only multiplies.
    # (Same as PyTorch: no guard against temperature ~ 0, inf/nan propagate.)
    inv_t = (1.0 / jnp.asarray(temperature, dtype=jnp.float32)).reshape(1)

    # -------------------- small-problem fast path -------------------------- #
    if use_fast_path is None:
        use_fast_path = _fits_fast_path(B, H, C, x.dtype, w.dtype)

    if use_fast_path:
        cost = pl.CostEstimate(
            flops=2 * B * H * C,
            transcendentals=0,
            bytes_accessed=(x.size * x.dtype.itemsize
                            + w.size * w.dtype.itemsize + 4 * B * C),
        )
        return pl.pallas_call(
            _small_fused_kernel,
            out_shape=jax.ShapeDtypeStruct((B, C), jnp.float32),
            in_specs=[
                pl.BlockSpec(memory_space=pltpu.MemorySpace.SMEM),   # 1/T scalar
                pl.BlockSpec(memory_space=pltpu.MemorySpace.VMEM),   # x whole
                pl.BlockSpec(memory_space=pltpu.MemorySpace.VMEM),   # w whole
            ],
            out_specs=pl.BlockSpec(memory_space=pltpu.MemorySpace.VMEM),
            cost_estimate=cost,
        )(inv_t, x, w)

    # ------------------------- tiled path ---------------------------------- #
    sub_m = _sublane_multiple(x.dtype)          # 8 (f32) / 16 (bf16) / 32 (i8,fp8)
    tm = min(tm, _round_up(B, sub_m))
    tk = min(tk, _round_up(H, 128))
    Cpad = _round_up(C, 128)

    # Only the K (reduction) tail needs zero padding for correctness. Edge
    # blocks along M / N are handled by Pallas partial reads + masked writes,
    # and the output is produced at its natural (B, C) shape (no final slice).
    Kp = _round_up(H, tk)
    if Kp != H:
        x = jnp.pad(x, ((0, 0), (0, Kp - H)))
        w = jnp.pad(w, ((0, Kp - H), (0, 0)))

    # Keep w resident in VMEM (one DMA total) whenever the classifier head is
    # small; otherwise stream (tk, tn) tiles with the usual (k, j) index map.
    if w_resident is None:
        w_resident = (Cpad <= _MAX_RESIDENT_TN
                      and Kp * Cpad * w.dtype.itemsize <= _W_RESIDENT_BYTES)
    if w_resident:
        tn = Cpad                                     # single N tile
        w_spec = pl.BlockSpec((Kp, Cpad), lambda i, j, k, _t: (0, 0))
    else:
        tn = min(tn, Cpad)
        w_spec = pl.BlockSpec((tk, tn), lambda i, j, k, _t: (k, j))

    grid = (pl.cdiv(B, tm), pl.cdiv(C, tn), Kp // tk)
    num_k = grid[2]

    kernel = _make_tiled_kernel(tk=tk, w_resident=w_resident, num_k=num_k)
    scratch = [pltpu.VMEM((tm, tn), jnp.float32)] if num_k > 1 else []

    cost = pl.CostEstimate(
        flops=2 * B * C * Kp,
        transcendentals=0,
        bytes_accessed=(x.size * x.dtype.itemsize
                        + w.size * w.dtype.itemsize + 4 * B * C),
    )

    out = pl.pallas_call(
        kernel,
        out_shape=jax.ShapeDtypeStruct((B, C), jnp.float32),
        grid_spec=pltpu.PrefetchScalarGridSpec(
            num_scalar_prefetch=1,    # inv_t -> SMEM, passed to kernel & index_maps
            grid=grid,
            in_specs=[
                pl.BlockSpec((tm, tk), lambda i, j, k, _t: (i, k)),   # x tile
                w_spec,                                               # w tile/resident
            ],
            out_specs=pl.BlockSpec((tm, tn), lambda i, j, k, _t: (i, j)),
            scratch_shapes=scratch,
        ),
        compiler_params=pltpu.CompilerParams(
            dimension_semantics=("parallel", "parallel", "arbitrary"),
            # Explicit: above v5e's 16 MiB default scoped limit, within v7x's
            # 64 MiB physical VMEM. Worst-case working set here is ~15 MiB.
            vmem_limit_bytes=32 * 1024 * 1024,
        ),
        cost_estimate=cost,
    )(inv_t, x, w)

    return out


# TODO(synk): set_temperature (LBFGS NLL calibration over a validation loader,
# calibration_curve printing, .cuda()/.half() movement) is host-side
# optimization glue with no Pallas equivalent.


# --------------------------------------------------------------------------- #
# Demo / self-check
# --------------------------------------------------------------------------- #
if __name__ == "__main__":
    key = jax.random.PRNGKey(0)
    kx, kw, kx2, kw2 = jax.random.split(key, 4)

    temperature = 1.5  # nn.Parameter(torch.ones(1) * 1.5)

    # --- module's real use case: small binary-classifier head (fast path) ---
    B, H, C = 8, 32, 2
    x = jax.random.normal(kx, (B, H), dtype=jnp.float32)
    w = jax.random.normal(kw, (H, C), dtype=jnp.float32) * 0.1
    ref = jnp.matmul(x, w, precision=jax.lax.Precision.HIGHEST) / jnp.float32(temperature)

    out = jax.block_until_ready(temperature_scaled_forward(x, w, temperature, cnn=False))
    assert out.shape == (B, C)
    assert jnp.allclose(out, ref, atol=2e-3, rtol=2e-3)

    # --- 1-D input -> unsqueeze(0) path --------------------------------------
    out1d = jax.block_until_ready(temperature_scaled_forward(x[0], w, temperature))
    assert out1d.shape == (1, C)
    assert jnp.allclose(out1d, ref[:1], atol=2e-3, rtol=2e-3)

    # --- tiled path: K tail padding, M edge block, resident w ----------------
    B2, H2, C2 = 384, 640, 160   # H2 not a multiple of tk, C2 not of 128, B2 not of tm
    x2 = jax.random.normal(kx2, (B2, H2), dtype=jnp.float32)
    w2 = jax.random.normal(kw2, (H2, C2), dtype=jnp.float32) * 0.05
    ref2 = jnp.matmul(x2, w2, precision=jax.lax.Precision.HIGHEST) / jnp.float32(temperature)

    out2 = jax.block_until_ready(
        temperature_scaled_forward(x2, w2, temperature, use_fast_path=False))
    assert out2.shape == (B2, C2)
    assert jnp.allclose(out2, ref2, atol=1e-2, rtol=1e-2)

    # --- same shapes, streamed-w (non-resident) tiled variant ----------------
    out3 = jax.block_until_ready(
        temperature_scaled_forward(x2, w2, temperature,
                                   use_fast_path=False, w_resident=False))
    assert jnp.allclose(out3, ref2, atol=1e-2, rtol=1e-2)

    # --- bf16 MXU-input variant (recommended on v6e/v7x), f32 accumulation ---
    out4 = jax.block_until_ready(
        temperature_scaled_forward(x2, w2, temperature,
                                   use_fast_path=False,
                                   matmul_dtype=jnp.bfloat16))
    assert jnp.allclose(out4, ref2, atol=5e-2, rtol=5e-2)

    print("KERNEL_OK")
</pallas_src>

<mosaic_0001>
module attributes {stable_mosaic.version = 11 : i64} {
  func.func @_small_fused_kernel(%arg0: memref<1xf32, #tpu.memory_space<smem>>, %arg1: memref<8x32xf32, #tpu.memory_space<vmem>>, %arg2: memref<32x2xf32, #tpu.memory_space<vmem>>, %arg3: memref<8x2xf32, #tpu.memory_space<vmem>>) attributes {dimension_semantics = [], scalar_prefetch = 0 : i64, scratch_operands = 0 : i64, tpu.core_type = #tpu.core_type<tc>} {
    %c0 = arith.constant 0 : index
    %c0_0 = arith.constant 0 : index
    %0 = vector.load %arg1[%c0, %c0_0] : memref<8x32xf32, #tpu.memory_space<vmem>>, vector<8x32xf32>
    %c0_1 = arith.constant 0 : index
    %c0_2 = arith.constant 0 : index
    %1 = vector.load %arg2[%c0_1, %c0_2] : memref<32x2xf32, #tpu.memory_space<vmem>>, vector<32x2xf32>
    %cst = arith.constant dense<0.000000e+00> : vector<8x2xf32>
    %2 = tpu.matmul %0, %1, %cst {dimension_numbers = #tpu.dot_dimension_numbers<[1], [0], [0], [1], [0, 0, 1, 1], [], []>} : vector<8x32xf32>, vector<32x2xf32>, vector<8x2xf32> -> vector<8x2xf32>
    %c0_3 = arith.constant 0 : index
    %3 = memref.load %arg0[%c0_3] : memref<1xf32, #tpu.memory_space<smem>>
    %4 = vector.broadcast %3 : f32 to vector<8x2xf32>
    %5 = arith.mulf %2, %4 : vector<8x2xf32>
    %c0_4 = arith.constant 0 : index
    %c0_5 = arith.constant 0 : index
    %6 = vector.load %arg3[%c0_4, %c0_5] : memref<8x2xf32, #tpu.memory_space<vmem>>, vector<8x2xf32>
    tpu.vector_store %arg3[%c0_4, %c0_5], %5 {strides = array<i32>} : memref<8x2xf32, #tpu.memory_space<vmem>>, vector<8x2xf32>,
    return
  }
}

</mosaic_0001>

<llo_original>
// kernel: tpu_custom_call.1
$region0: #{tpu_custom_call.1}
  #allocation0 [shape = 'u32[]', space=smem, size = 0x4, offset = 0x4, fixed_abs, tag = 'smem constant byte address 0x4 - core index']
  #allocation1 [shape = 'u32[72,128]{1,0:T(1,128)}', space=vmem, size = 0x9000, scoped, tag = 'internal scratch']
  #allocation2 [shape = 'f32[1]{0:T(128)S(6)}', space=smem, size = 0x200, scoped, tag = 'scoped memory for tpu_custom_call.1']
  %s0 = inlined_call_operand.<no memory space> [shape: f32[1], index: 0, kind: input, shape index: {}]
  %s1 = inlined_call_operand.vmem [shape: f32[8,32], index: 1, kind: input, shape index: {}]
  %s2 = inlined_call_operand.vmem [shape: f32[32,2], index: 2, kind: input, shape index: {}]
  %s3 = inlined_call_operand.vmem [shape: f32[8,2], index: 3, kind: output, shape index: {}]
  %s4 = sld [smem:[#allocation0]]
  $region22: #{tpu_custom_call.1} parent=0
    _
  %s6 = ssub.s32 1, %s4
  %s7 = scalar_select 0, %s6, %s4
  %8 = sst [smem:[#allocation2]] %s0
  // Predicated region
  $region2: #{tpu_custom_call.1} parent=0 // pred_check
    _
  $region3: #{tpu_custom_call.1} parent=0 // pred_check_branch
    %10 = sbr.rel (0) target = $region5
  $region4: #{tpu_custom_call.1} parent=0 // pred_region
    _
  $region5: #{tpu_custom_call.1} parent=0 // pred_fallthru
    _
  // Predicated region
  $region6: #{tpu_custom_call.1} parent=0 // pred_check
    _
  $region7: #{tpu_custom_call.1} parent=0 // pred_check_branch
    %12 = sbr.rel (0) target = $region9
  $region8: #{tpu_custom_call.1} parent=0 // pred_region
    _
  $region9: #{tpu_custom_call.1} parent=0 // pred_fallthru
    _
  // Predicated region
  $region10: #{tpu_custom_call.1} parent=0 // pred_check
    _
  $region11: #{tpu_custom_call.1} parent=0 // pred_check_branch
    %14 = sbr.rel (0) target = $region13
  $region12: #{tpu_custom_call.1} parent=0 // pred_region
    _
  $region13: #{tpu_custom_call.1} parent=0 // pred_fallthru
    _
  %v15 = vld [vmem:[%s1] sm:$0xff]
  %v16 = vld [vmem:[%s2] sm:$0xff]
  %v17 = vld [vmem:[%s2 + $0x8] sm:$0xff]
  %v18 = vld [vmem:[%s2 + $0x10] sm:$0xff]
  %v19 = vld [vmem:[%s2 + $0x18] sm:$0xff]
  %vm20 = vcmask 261120
  %v22 = vsel %vm20, %v15, 0
  %24 = vmatpush.msra.mxu0 0.0
  %25 = vmatpush.msra.mxu0 0.0
  %26 = vmatpush.msra.mxu0 0.0
  %27 = vmatpush.msra.mxu0 0.0
  %28 = vmatpush.msra.mxu0 0.0
  %29 = vmatpush.msra.mxu0 0.0
  %30 = vmatpush.msra.mxu0 0.0
  %31 = vmatpush.msra.mxu0 0.0
  %32 = vmatpush.msra.mxu0 0.0
  %33 = vmatpush.msra.mxu0 0.0
  %34 = vmatpush.msra.mxu0 0.0
  %35 = vmatpush.msra.mxu0 0.0
  %36 = vmatpush.msra.mxu0 %v19
  %37 = vmatpush.msra.mxu0 %v18
  %38 = vmatpush.msra.mxu0 %v17
  %39 = vmatpush.msra.mxu0 %v16
  %40 = vmatmul.f32.gmra.mxu0 %v22
  %v41 = vpop.f32.mrf.mxu0
  %v42 = vadd.f32 0.0, %v41
  %43 = vdwg.mxu0
  %s44 = sld [smem:[#allocation2]]
  %v45 = vstv %s44
  %v46 = vmul.f32 %v42, %v45
  %vm47 = vcmask 15360
  %48 = vst.msk [vmem:[%s3] sm:$0xff] %vm47, %v46
  // Predicated region
  $region14: #{tpu_custom_call.1} parent=0 // pred_check
    _
  $region15: #{tpu_custom_call.1} parent=0 // pred_check_branch
    %50 = sbr.rel (0) target = $region17
  $region16: #{tpu_custom_call.1} parent=0 // pred_region
    _
  $region17: #{tpu_custom_call.1} parent=0 // pred_fallthru
    _
  // Predicated region
  $region18: #{tpu_custom_call.1} parent=0 // pred_check
    _
  $region19: #{tpu_custom_call.1} parent=0 // pred_check_branch
    %52 = sbr.rel (0) target = $region21
  $region20: #{tpu_custom_call.1} parent=0 // pred_region
    _
  $region21: #{tpu_custom_call.1} parent=0 // pred_fallthru
    _

</llo_original>
